<compile_context>
chip_gen: v7x
topology: tpu7x:2x2x1
jax: 0.10.0
libtpu: 0.0.40
codegen_flags: <defaults>
</compile_context>

<pallas_src>
import numpy as np
import jax
import jax.numpy as jnp
from jax import lax
from jax.experimental import pallas as pl
from jax.experimental.pallas import tpu as pltpu


def _decoder_kernel(bias_ref, x_ref, bfix_ref, w_ref, o_ref):
    g = pl.program_id(0)
    w = w_ref[0]                       # [2s, F]; row k == kernel tap k
    s = w.shape[0] // 2
    bias_g = bias_ref[g]               # scalar from SMEM

    # Small static batch block -> unrolled; each iteration is one MXU matmul
    # plus VPU adds (the kernel is HBM-bytes bound, compute has large slack).
    for b in range(x_ref.shape[0]):
        x = x_ref[b, 0]                # [F, Tt]   (time on lanes)
        # Fused MXU matmul: p[k, q] = sum_f w[k, f] * x[f, q]  -> [2s, Tt]
        p = lax.dot_general(w, x, (((1,), (0,)), ((), ())),
                            preferred_element_type=jnp.float32)
        a_part = p[s:]                 # taps s..2s-1 -> output column q
        b_part = p[:s]                 # taps 0..s-1  -> output column q-1
        # Output column q needs b_part column q+1.  The value for this tile's
        # last column (first column of the NEXT tile, zero past the end of the
        # signal) arrives precomputed as a tiny [s, 1] block.
        b_shift = jnp.concatenate([b_part[:, 1:], bfix_ref[0, b, 0]], axis=1)
        o_ref[b, 0] = (a_part + b_shift + bias_g).astype(o_ref.dtype)


def _pick_t_tile(T: int) -> int:
    # Big tiles: per-grid-step fixed overhead (~0.35us) dwarfs per-tile work at
    # small tiles; prefer the largest candidate that divides T exactly.
    for cand in (8192, 4096, 2048, 1024, 512, 256, 128):
        if T % cand == 0:
            return cand
    if T <= 8192:
        # Ragged / small T: one full-width tile, padded up to a lane multiple.
        return pl.cdiv(T, 128) * 128 if T >= 128 else T
    # Ragged large T: bounded zero-padding waste (< 1024 columns).
    return 1024


def adaptive_decoder_1d(x, weight, bias, *, freq_res, sample_res, n_sources,
                        t_tile=None, b_blk=None, compute_dtype=None,
                        out_dtype=jnp.float32):
    """x: [B, n_sources*freq_res, T] -> y: [B, n_sources, T*(sample_res//2) - 1]."""
    B, C, T = x.shape
    G, F, S = n_sources, freq_res, sample_res
    assert C == G * F
    # TODO(synk): odd sample_res would need a 3-phase decomposition; the module
    # is only used with even sample_res (stride = kernel // 2).
    assert S % 2 == 0
    s = S // 2

    if compute_dtype is not None:            # e.g. jnp.bfloat16 (halves x/W HBM bytes)
        x = x.astype(compute_dtype)
    x4 = x.reshape(B, G, F, T)
    # Fused weight [G, 2s, F]: row k holds tap k (W_full[g,k,f] = W[g*F+f,0,k]).
    w_full = jnp.transpose(weight.reshape(G, F, S), (0, 2, 1)).astype(x4.dtype)
    bias_f32 = bias.astype(jnp.float32)

    if t_tile is None:
        t_tile = _pick_t_tile(T)
    nt = pl.cdiv(T, t_tile)
    T_pad = nt * t_tile
    if T_pad != T:                           # zero-pad -> no OOB garbage, trimmed below
        x4 = jnp.pad(x4, ((0, 0), (0, 0), (0, 0), (0, T_pad - T)))

    # Precomputed boundary fix (perf review item): the first column of each
    # NEXT tile (zero past the end) contracted with the "B" taps, wrapper-side.
    # Shape [nt, B, G, s, 1]; streamed into the kernel as a 32-byte block.
    xb = x4[:, :, :, t_tile::t_tile]                        # [B, G, F, nt-1]
    xb = jnp.pad(xb, ((0, 0), (0, 0), (0, 0), (0, 1)))      # [B, G, F, nt]
    bfix = jnp.einsum('grf,bgft->tbgr',
                      w_full[:, :s, :].astype(jnp.float32),
                      xb.astype(jnp.float32))[..., None]    # [nt, B, G, s, 1] f32

    itemsize = jnp.dtype(x4.dtype).itemsize
    if b_blk is None:
        # Fold the batch axis into each grid step (amortize step overhead) while
        # keeping the double-buffered x block comfortably inside VMEM.
        budget = 4 * 1024 * 1024
        b_blk = int(min(B, 8, max(1, budget // (F * t_tile * itemsize))))
        while B % b_blk:
            b_blk -= 1
    assert B % b_blk == 0
    nb = B // b_blk

    cost = pl.CostEstimate(
        flops=2 * B * G * S * F * T_pad,
        transcendentals=0,
        bytes_accessed=(B * G * F * T_pad * itemsize                 # x stream
                        + nt * B * G * s * 4                         # boundary fixes
                        + G * S * F * itemsize                       # weights
                        + B * G * s * T_pad * jnp.dtype(out_dtype).itemsize))

    out4 = pl.pallas_call(
        _decoder_kernel,
        out_shape=jax.ShapeDtypeStruct((B, G, s, T_pad), out_dtype),
        grid=(G, nb, nt),
        in_specs=[
            pl.BlockSpec(memory_space=pltpu.MemorySpace.SMEM),             # bias [G]
            pl.BlockSpec((b_blk, 1, F, t_tile), lambda g, b, t: (b, g, 0, t)),      # x
            pl.BlockSpec((1, b_blk, 1, s, 1), lambda g, b, t: (t, b, g, 0, 0)),     # bfix
            pl.BlockSpec((1, S, F), lambda g, b, t: (g, 0, 0)),                     # W
        ],
        out_specs=pl.BlockSpec((b_blk, 1, s, t_tile), lambda g, b, t: (b, g, 0, t)),
        compiler_params=pltpu.CompilerParams(
            dimension_semantics=("parallel", "parallel", "parallel"),
            vmem_limit_bytes=32 * 1024 * 1024),
        cost_estimate=cost,
    )(bias_f32, x4, bfix, w_full)

    # Interleave back to the waveform: y[b, g, q*s + r] = out4[b, g, r, q].
    # transpose + reshape + trim fuse into a single XLA copy pass.
    L_out = T * s - 1
    y = jnp.transpose(out4, (0, 1, 3, 2)).reshape(B, G, T_pad * s)
    return y[:, :, :L_out]


def _ref_conv_transpose1d(x, weight, bias, *, stride, padding, output_padding, groups):
    """Vectorized numpy reference for grouped ConvTranspose1d (PyTorch semantics)."""
    x = np.asarray(x, dtype=np.float64)
    w = np.asarray(weight, dtype=np.float64)
    b = np.asarray(bias, dtype=np.float64)
    B, C_in, T = x.shape
    G = groups
    F = C_in // G
    K = w.shape[2]
    L = (T - 1) * stride - 2 * padding + (K - 1) + output_padding + 1
    xg = x.reshape(B, G, F, T)
    wg = w.reshape(G, F, K)                    # out_channels // groups == 1
    contrib = np.einsum('bgft,gfk->bgkt', xg, wg)
    full = np.zeros((B, G, (T - 1) * stride + K), dtype=np.float64)
    for k in range(K):
        full[:, :, k:k + (T - 1) * stride + 1:stride] += contrib[:, :, k, :]
    return full[:, :, padding:padding + L] + b.reshape(1, G, 1)


if __name__ == "__main__":
    freq_res, sample_res, n_sources = 32, 16, 2
    batch, T = 2, 512

    key = jax.random.PRNGKey(0)
    k1, k2, k3 = jax.random.split(key, 3)
    x = jax.random.normal(k1, (batch, n_sources * freq_res, T), dtype=jnp.float32)
    # ConvTranspose1d weight shape: [in_channels, out_channels // groups, kernel]
    weight = 0.1 * jax.random.normal(
        k2, (n_sources * freq_res, 1, sample_res), dtype=jnp.float32)
    bias = 0.1 * jax.random.normal(k3, (n_sources,), dtype=jnp.float32)

    y_ref = _ref_conv_transpose1d(
        x, weight, bias,
        stride=sample_res // 2, padding=sample_res // 2,
        output_padding=sample_res // 2 - 1, groups=n_sources)

    # Multi-tile, un-folded batch (exercises cross-tile boundary fix + grid path).
    y_tiled = adaptive_decoder_1d(x, weight, bias, freq_res=freq_res,
                                  sample_res=sample_res, n_sources=n_sources,
                                  t_tile=128, b_blk=1)
    y_tiled = jax.block_until_ready(y_tiled)
    assert y_tiled.shape == y_ref.shape, (y_tiled.shape, y_ref.shape)
    np.testing.assert_allclose(np.asarray(y_tiled), y_ref, rtol=1e-4, atol=1e-4)

    # Default config: one big time tile, batch folded into the block.
    y_full = adaptive_decoder_1d(x, weight, bias, freq_res=freq_res,
                                 sample_res=sample_res, n_sources=n_sources)
    y_full = jax.block_until_ready(y_full)
    np.testing.assert_allclose(np.asarray(y_full), y_ref, rtol=1e-4, atol=1e-4)

    # bf16 bandwidth path (inputs quantized, f32 accumulation) -> loose tolerance.
    y_bf16 = adaptive_decoder_1d(x, weight, bias, freq_res=freq_res,
                                 sample_res=sample_res, n_sources=n_sources,
                                 compute_dtype=jnp.bfloat16)
    y_bf16 = jax.block_until_ready(y_bf16)
    np.testing.assert_allclose(np.asarray(y_bf16), y_ref, rtol=0, atol=5e-2)

    print("KERNEL_OK")
</pallas_src>

<mosaic_0001>
module attributes {stable_mosaic.version = 11 : i64} {
  func.func @_decoder_kernel(%arg0: i32, %arg1: i32, %arg2: i32, %arg3: memref<2xf32, #tpu.memory_space<smem>>, %arg4: memref<1x1x32x128xf32, #tpu.memory_space<vmem>>, %arg5: memref<1x1x1x8x1xf32, #tpu.memory_space<vmem>>, %arg6: memref<1x16x32xf32, #tpu.memory_space<vmem>>, %arg7: memref<1x1x8x128xf32, #tpu.memory_space<vmem>>) attributes {dimension_semantics = [#tpu.dimension_semantics<parallel>, #tpu.dimension_semantics<parallel>, #tpu.dimension_semantics<parallel>], iteration_bounds = array<i64: 2, 2, 4>, scalar_prefetch = 0 : i64, scratch_operands = 0 : i64, tpu.core_type = #tpu.core_type<tc>, window_params = [{transform_indices = @transform_0, window_bounds = array<i64: 2>}, {transform_indices = @transform_1, window_bounds = array<i64: 1, 1, 32, 128>}, {transform_indices = @transform_2, window_bounds = array<i64: 1, 1, 1, 8, 1>}, {transform_indices = @transform_3, window_bounds = array<i64: 1, 16, 32>}, {transform_indices = @transform_4, window_bounds = array<i64: 1, 1, 8, 128>}]} {
    %c0 = arith.constant 0 : index
    %c0_0 = arith.constant 0 : index
    %c0_1 = arith.constant 0 : index
    %0 = vector.load %arg6[%c0, %c0_0, %c0_1] : memref<1x16x32xf32, #tpu.memory_space<vmem>>, vector<1x16x32xf32>
    %1 = vector.shape_cast %0 : vector<1x16x32xf32> to vector<16x32xf32>
    %2 = arith.index_cast %arg0 : i32 to index
    %3 = memref.load %arg3[%2] : memref<2xf32, #tpu.memory_space<smem>>
    %c0_2 = arith.constant 0 : index
    %c0_3 = arith.constant 0 : index
    %c0_4 = arith.constant 0 : index
    %c0_5 = arith.constant 0 : index
    %4 = vector.load %arg4[%c0_2, %c0_3, %c0_4, %c0_5] : memref<1x1x32x128xf32, #tpu.memory_space<vmem>>, vector<1x1x32x128xf32>
    %5 = vector.shape_cast %4 : vector<1x1x32x128xf32> to vector<32x128xf32>
    %cst = arith.constant dense<0.000000e+00> : vector<16x128xf32>
    %6 = tpu.matmul %1, %5, %cst {dimension_numbers = #tpu.dot_dimension_numbers<[1], [0], [0], [1], [0, 0, 1, 1], [], []>} : vector<16x32xf32>, vector<32x128xf32>, vector<16x128xf32> -> vector<16x128xf32>
    %7 = vector.extract_strided_slice %6 {offsets = [8, 0], sizes = [8, 128], strides = [1, 1]} : vector<16x128xf32> to vector<8x128xf32>
    %8 = vector.extract_strided_slice %6 {offsets = [0, 0], sizes = [8, 128], strides = [1, 1]} : vector<16x128xf32> to vector<8x128xf32>
    %9 = vector.extract_strided_slice %8 {offsets = [0, 1], sizes = [8, 127], strides = [1, 1]} : vector<8x128xf32> to vector<8x127xf32>
    %c0_6 = arith.constant 0 : index
    %c0_7 = arith.constant 0 : index
    %c0_8 = arith.constant 0 : index
    %c0_9 = arith.constant 0 : index
    %c0_10 = arith.constant 0 : index
    %10 = vector.load %arg5[%c0_6, %c0_7, %c0_8, %c0_9, %c0_10] : memref<1x1x1x8x1xf32, #tpu.memory_space<vmem>>, vector<1x1x1x8x1xf32>
    %11 = vector.shape_cast %10 : vector<1x1x1x8x1xf32> to vector<8x1xf32>
    %12 = tpu.concatenate %9, %11 in 1 : vector<8x127xf32>, vector<8x1xf32> -> vector<8x128xf32>
    %13 = arith.addf %7, %12 : vector<8x128xf32>
    %14 = vector.broadcast %3 : f32 to vector<8x128xf32>
    %15 = arith.addf %13, %14 : vector<8x128xf32>
    %c0_11 = arith.constant 0 : index
    %c0_12 = arith.constant 0 : index
    %c0_13 = arith.constant 0 : index
    %c0_14 = arith.constant 0 : index
    %16 = vector.load %arg7[%c0_11, %c0_12, %c0_13, %c0_14] : memref<1x1x8x128xf32, #tpu.memory_space<vmem>>, vector<1x1x8x128xf32>
    %17 = vector.shape_cast %16 : vector<1x1x8x128xf32> to vector<8x128xf32>
    %18 = vector.shape_cast %15 : vector<8x128xf32> to vector<1x1x8x128xf32>
    tpu.vector_store %arg7[%c0_11, %c0_12, %c0_13, %c0_14], %18 {strides = array<i32>} : memref<1x1x8x128xf32, #tpu.memory_space<vmem>>, vector<1x1x8x128xf32>,
    return
  }
  func.func @transform_0(%arg0: i32, %arg1: i32, %arg2: i32) -> i32 {
    %c0_i32 = arith.constant 0 : i32
    %c0_i32_0 = arith.constant 0 : i32
    return %c0_i32 : i32
  }
  func.func @transform_1(%arg0: i32, %arg1: i32, %arg2: i32) -> (i32, i32, i32, i32) {
    %c0_i32 = arith.constant 0 : i32
    %c0_i32_0 = arith.constant 0 : i32
    return %arg1, %arg0, %c0_i32, %arg2 : i32, i32, i32, i32
  }
  func.func @transform_2(%arg0: i32, %arg1: i32, %arg2: i32) -> (i32, i32, i32, i32, i32) {
    %c0_i32 = arith.constant 0 : i32
    %c0_i32_0 = arith.constant 0 : i32
    %c0_i32_1 = arith.constant 0 : i32
    return %arg2, %arg1, %arg0, %c0_i32, %c0_i32_0 : i32, i32, i32, i32, i32
  }
  func.func @transform_3(%arg0: i32, %arg1: i32, %arg2: i32) -> (i32, i32, i32) {
    %c0_i32 = arith.constant 0 : i32
    %c0_i32_0 = arith.constant 0 : i32
    %c0_i32_1 = arith.constant 0 : i32
    return %arg0, %c0_i32, %c0_i32_0 : i32, i32, i32
  }
  func.func @transform_4(%arg0: i32, %arg1: i32, %arg2: i32) -> (i32, i32, i32, i32) {
    %c0_i32 = arith.constant 0 : i32
    %c0_i32_0 = arith.constant 0 : i32
    return %arg1, %arg0, %c0_i32, %arg2 : i32, i32, i32, i32
  }
}

</mosaic_0001>

<llo_original>
// kernel: tpu_custom_call.1
$region0: #{tpu_custom_call.1}
  #allocation0 [shape = 'u32[]', space=smem, size = 0x4, offset = 0x4, fixed_abs, tag = 'smem constant byte address 0x4 - core index']
  #allocation1 [shape = 'u32[144,128]{1,0:T(1,128)}', space=vmem, size = 0x12000, scoped, tag = 'internal scratch']
  %s0 = inlined_call_operand.vmem [shape: f32[2], index: 0, kind: input, shape index: {}]
  %s1 = inlined_call_operand.hbm [shape: f32[2,2,32,512], index: 1, kind: input, shape index: {}]
  %s2 = inlined_call_operand.vmem [shape: f32[4,2,2,8,1], index: 2, kind: input, shape index: {}]
  %s3 = inlined_call_operand.vmem [shape: f32[2,16,32], index: 3, kind: input, shape index: {}]
  %s4 = inlined_call_operand.hbm [shape: f32[2,2,8,512], index: 4, kind: output, shape index: {}]
  %s5 = sld [smem:[#allocation0]]
  $region57: #{tpu_custom_call.1} parent=0
    _
  %s7 = ssub.s32 1, %s5
  %s8 = scalar_select 0, %s7, %s5
  $region1: #{tpu_custom_call.1} parent=0
    #allocation2 [shape = 'u8[512]{0}', space=smem, size = 0x200, scoped, tag = 'input window, operand 0, single buffered']
    #allocation3 [shape = 's32[2]{0}', space=sflag, size = 0x8, scoped, tag = 'scoped memory for tpu_custom_call.1']
    #allocation4 [shape = 's32[2]{0}', space=sflag, size = 0x8, scoped, tag = 'scoped memory for tpu_custom_call.1']
    #allocation5 [shape = 's32[2]{0}', space=sflag, size = 0x8, scoped, tag = 'scoped memory for tpu_custom_call.1']
    #allocation6 [shape = 'u8[32768]{0}', space=vmem, size = 0x8000, scoped, tag = 'input window, operand 1']
    #allocation7 [shape = 'u8[8192]{0}', space=vmem, size = 0x2000, scoped, tag = 'output window, operand 0']
    %9 = vsyncpa [#allocation5], 0
    %10 = vsyncpa [#allocation3], 0
    %s11 = scalar_lea.sflag [#allocation3], 1
    %12 = vsyncpa %s11, 0
    %13 = vsyncpa [#allocation4], 0
    %s14 = scalar_lea.sflag [#allocation4], 1
    %15 = vsyncpa %s14, 0
    loop: start=0, step=1, limit=18
    $region2: #{tpu_custom_call.1} parent=1 // loop_pre_header
      _
    $region3: #{tpu_custom_call.1} parent=1 // loop_header
      %s17 = sphi 0, %s21
      %p18 = scmp.ge.s32.totalorder %s17, 18
      %s24 = sphi 0, %s43
      %s25 = sphi 0, %s39
      %s26 = sphi 0, %s35
      %s27 = sphi 0, %s24
      %s28 = sphi 0, %s25
      %s29 = sphi 0, %s26
      %s30 = sphi 0, %s27
      %s31 = sphi 0, %s28
      %s32 = sphi 0, %s29
      %s44 = sphi 0, %s44
      %s46 = sphi 0, %s44
      %s47 = sphi 0, %s46
      %s61 = sphi 0, %s47
      %s71 = sphi 0, %s73
      %s74 = sphi 0, %s71
      %s75 = sphi 0, %s74
      %s91 = sphi 0, %s75
      %s101 = sphi 0, %s103
      %s104 = sphi 0, %s101
      %s105 = sphi 0, %s104
      %s121 = sphi 0, %s105
      %s127 = sphi 0, %s129
      %s130 = sphi 0, %s127
      %s131 = sphi 0, %s130
      %s147 = sphi 0, %s131
      %s157 = sphi 0, %s159
      %s160 = sphi 0, %s157
      %s161 = sphi 0, %s160
      %s177 = sphi 0, %s161
    $region4: #{tpu_custom_call.1} parent=1 // loop_header_branch
      %20 = sbr.rel (%p18) target = $region8
    $region5: #{tpu_custom_call.1} parent=1 // loop_body
      %s22 = ssub.s32 %s17, 1
      %s23 = ssub.s32 %s17, 2
      %s33 = sadd.s32 1, %s26
      %p34 = scmp.ge.s32.totalorder %s33, 4
      %s35 = scalar_select %p34, 0, %s33
      %s36 = sadd.s32 1, %s25
      %s37 = scalar_select %p34, %s36, %s25
      %p38 = scmp.ge.s32.totalorder %s37, 2
      %s39 = scalar_select %p38, 0, %s37
      %s40 = sadd.s32 1, %s24
      %s41 = scalar_select %p38, %s40, %s24
      %p42 = scmp.ge.s32.totalorder %s41, 2
      %s43 = scalar_select %p42, 0, %s41
      %s45 = sadd.s32 %s44, 1
      %p48 = scmp.eq.s32.totalorder %s17, 15
      %p49 = scmp.ne.s32.totalorder %s44, %s46
      %p50 = scmp.eq.s32.totalorder %s17, 0
      %p51 = por %p49, %p50
      %p52 = scmp.ne.s32.totalorder %s44, %s46
      %p53 = scmp.eq.s32.totalorder %s22, 15
      %p54 = por %p52, %p53
      %p55 = scmp.ne.s32.totalorder %s46, %s47
      %p56 = scmp.eq.s32.totalorder %s22, 0
      %p57 = por %p55, %p56
      %p58 = scmp.ne.s32.totalorder %s46, %s47
      %p59 = scmp.eq.s32.totalorder %s23, 15
      %p60 = por %p58, %p59
      %p62 = scmp.ne.s32.totalorder %s47, %s61
      %p63 = scmp.eq.s32.totalorder %s23, 0
      %p64 = por %p62, %p63
      %s65 = ssub.s32 %s25, %s39
      %s66 = ssub.s32 %s24, %s43
      %s67 = sor.u32 %s65, %s66
      %s68 = ssub.s32 %s26, %s35
      %s69 = sor.u32 %s67, %s68
      %p70 = scmp.eq.s32.totalorder %s69, 0
      %s72 = sadd.s32 %s71, 1
      %s73 = scalar_select %p70, %s71, %s72
      %p76 = pneg %p70
      %p77 = scmp.eq.s32.totalorder %s17, 15
      %p78 = por %p76, %p77
      %p79 = scmp.ne.s32.totalorder %s71, %s74
      %p80 = scmp.eq.s32.totalorder %s17, 0
      %p81 = por %p79, %p80
      %p82 = scmp.ne.s32.totalorder %s71, %s74
      %p83 = scmp.eq.s32.totalorder %s22, 15
      %p84 = por %p82, %p83
      %p85 = scmp.ne.s32.totalorder %s74, %s75
      %p86 = scmp.eq.s32.totalorder %s22, 0
      %p87 = por %p85, %p86
      %p88 = scmp.ne.s32.totalorder %s74, %s75
      %p89 = scmp.eq.s32.totalorder %s23, 15
      %p90 = por %p88, %p89
      %p92 = scmp.ne.s32.totalorder %s75, %s91
      %p93 = scmp.eq.s32.totalorder %s23, 0
      %p94 = por %p92, %p93
      %s95 = ssub.s32 %s26, %s35
      %s96 = ssub.s32 %s25, %s39
      %s97 = sor.u32 %s95, %s96
      %s98 = ssub.s32 %s24, %s43
      %s99 = sor.u32 %s97, %s98
      %p100 = scmp.eq.s32.totalorder %s99, 0
      %s102 = sadd.s32 %s101, 1
      %s103 = scalar_select %p100, %s101, %s102
      %p106 = pneg %p100
      %p107 = scmp.eq.s32.totalorder %s17, 15
      %p108 = por %p106, %p107
      %p109 = scmp.ne.s32.totalorder %s101, %s104
      %p110 = scmp.eq.s32.totalorder %s17, 0
      %p111 = por %p109, %p110
      %p112 = scmp.ne.s32.totalorder %s101, %s104
      %p113 = scmp.eq.s32.totalorder %s22, 15
      %p114 = por %p112, %p113
      %p115 = scmp.ne.s32.totalorder %s104, %s105
      %p116 = scmp.eq.s32.totalorder %s22, 0
      %p117 = por %p115, %p116
      %p118 = scmp.ne.s32.totalorder %s104, %s105
      %p119 = scmp.eq.s32.totalorder %s23, 15
      %p120 = por %p118, %p119
      %p122 = scmp.ne.s32.totalorder %s105, %s121
      %p123 = scmp.eq.s32.totalorder %s23, 0
      %p124 = por %p122, %p123
      %s125 = ssub.s32 %s24, %s43
      %p126 = scmp.eq.s32.totalorder %s125, 0
      %s128 = sadd.s32 %s127, 1
      %s129 = scalar_select %p126, %s127, %s128
      %p132 = pneg %p126
      %p133 = scmp.eq.s32.totalorder %s17, 15
      %p134 = por %p132, %p133
      %p135 = scmp.ne.s32.totalorder %s127, %s130
      %p136 = scmp.eq.s32.totalorder %s17, 0
      %p137 = por %p135, %p136
      %p138 = scmp.ne.s32.totalorder %s127, %s130
      %p139 = scmp.eq.s32.totalorder %s22, 15
      %p140 = por %p138, %p139
      %p141 = scmp.ne.s32.totalorder %s130, %s131
      %p142 = scmp.eq.s32.totalorder %s22, 0
      %p143 = por %p141, %p142
      %p144 = scmp.ne.s32.totalorder %s130, %s131
      %p145 = scmp.eq.s32.totalorder %s23, 15
      %p146 = por %p144, %p145
      %p148 = scmp.ne.s32.totalorder %s131, %s147
      %p149 = scmp.eq.s32.totalorder %s23, 0
      %p150 = por %p148, %p149
      %s151 = ssub.s32 %s25, %s39
      %s152 = ssub.s32 %s24, %s43
      %s153 = sor.u32 %s151, %s152
      %s154 = ssub.s32 %s26, %s35
      %s155 = sor.u32 %s153, %s154
      %p156 = scmp.eq.s32.totalorder %s155, 0
      %s158 = sadd.s32 %s157, 1
      %s159 = scalar_select %p156, %s157, %s158
      %p162 = pneg %p156
      %p163 = scmp.eq.s32.totalorder %s17, 15
      %p164 = por %p162, %p163
      %p165 = scmp.ne.s32.totalorder %s157, %s160
      %p166 = scmp.eq.s32.totalorder %s17, 0
      %p167 = por %p165, %p166
      %p168 = scmp.ne.s32.totalorder %s157, %s160
      %p169 = scmp.eq.s32.totalorder %s22, 15
      %p170 = por %p168, %p169
      %p171 = scmp.ne.s32.totalorder %s160, %s161
      %p172 = scmp.eq.s32.totalorder %s22, 0
      %p173 = por %p171, %p172
      %p174 = scmp.ne.s32.totalorder %s160, %s161
      %p175 = scmp.eq.s32.totalorder %s23, 15
      %p176 = por %p174, %p175
      %p178 = scmp.ne.s32.totalorder %s161, %s177
      %p179 = scmp.eq.s32.totalorder %s23, 0
      %p180 = por %p178, %p179
      %p181 = scmp.le.s32.totalorder 1, %s17
      %p182 = scmp.lt.s32.totalorder %s17, 17
      %p183 = pnand %p181, %p182
      %p184 = pneg %p183
      // Predicated region
      $region9: #{tpu_custom_call.1} parent=5 // pred_check
        _
      $region10: #{tpu_custom_call.1} parent=5 // pred_check_branch
        %186 = sbr.rel (%p183) target = $region12
      $region11: #{tpu_custom_call.1} parent=5 // pred_region
        %s187 = ssub.s32 %s17, 1
        // Predicated region
        $region13: #{tpu_custom_call.1} parent=11 // pred_check
          %p188 = pneg %p57
        $region14: #{tpu_custom_call.1} parent=11 // pred_check_branch
          %190 = sbr.rel (%p188) target = $region16
        $region15: #{tpu_custom_call.1} parent=11 // pred_region
          %s192 = ssub.s32 16, 16
          %193 = vsyncadd [#allocation5], %s192
          %s195 = sshll.u32 %s0, 4
          %s196 = int_to_ptr.vmem [resolvable:$true] %s195
          %198 = dma.vmem_to_smem %s196, 16, [#allocation2], [#allocation5]
        $region16: #{tpu_custom_call.1} parent=11 // pred_fallthru
          _
      $region12: #{tpu_custom_call.1} parent=5 // pred_fallthru
        _
      %p199 = scmp.lt.s32.totalorder %s17, 16
      // Predicated region
      $region17: #{tpu_custom_call.1} parent=5 // pred_check
        %p200 = pneg %p199
      $region18: #{tpu_custom_call.1} parent=5 // pred_check_branch
        %202 = sbr.rel (%p200) target = $region20
      $region19: #{tpu_custom_call.1} parent=5 // pred_region
        // Predicated region
        $region21: #{tpu_custom_call.1} parent=19 // pred_check
          %p203 = pneg %p81
        $region22: #{tpu_custom_call.1} parent=19 // pred_check_branch
          %205 = sbr.rel (%p203) target = $region24
        $region23: #{tpu_custom_call.1} parent=19 // pred_region
          %s206 = sand.u32 %s71, 1
          %s207 = scalar_lea.sflag [#allocation3], %s206
          %s208 = sand.u32 %s71, 1
          %s209 = smul.addr %s208, 32
          %s210 = scalar_lea.vmem [#allocation6], %s209
          %s212 = ssub.s32 512, 512
          %213 = vsyncadd %s207, %s212
          %s214 = smul.addr %s24, 16
          %s215 = sadd.s32 %s26, %s214
          %s216 = smul.addr %s25, 32
          %s217 = sadd.s32 %s215, %s216
          %s218 = smul.addr %s217, 128
          %s219 = scalar_lea.hbm %s1, %s218
          %s220 = sshll.u32 %s210, 4
          %s221 = int_to_ptr.vmem [resolvable:$true] %s220
          %226 = dma.hbm_to_vmem [thread:$0]  %s219, 512, %s221, %s207, 512, 128, 8
        $region24: #{tpu_custom_call.1} parent=19 // pred_fallthru
          _
        // Predicated region
        $region25: #{tpu_custom_call.1} parent=19 // pred_check
          %p227 = pneg %p111
        $region26: #{tpu_custom_call.1} parent=19 // pred_check_branch
          %229 = sbr.rel (%p227) target = $region28
        $region27: #{tpu_custom_call.1} parent=19 // pred_region
          %p230 = scmp.lt.s32.totalorder %s26, 3
          %s231 = scalar_select %p230, %s26, 3
          %p232 = scmp.lt.s32.totalorder %s25, 1
          %s233 = scalar_select %p232, %s25, 1
          %p234 = scmp.lt.s32.totalorder %s24, 1
          %s235 = scalar_select %p234, %s24, 1
          %s236 = smul.addr %s233, 2
          %s237 = sadd.s32 %s235, %s236
          %s238 = smul.addr %s231, 4
          %s239 = sadd.s32 %s237, %s238
          %s240 = smul.addr %s239, 8
          %s241 = scalar_lea.vmem %s2, %s240
        $region28: #{tpu_custom_call.1} parent=19 // pred_fallthru
          _
        // Predicated region
        $region29: #{tpu_custom_call.1} parent=19 // pred_check
          %p242 = pneg %p137
        $region30: #{tpu_custom_call.1} parent=19 // pred_check_branch
          %244 = sbr.rel (%p242) target = $region32
        $region31: #{tpu_custom_call.1} parent=19 // pred_region
          %p245 = scmp.lt.s32.totalorder %s24, 1
          %s246 = scalar_select %p245, %s24, 1
          %s247 = smul.addr %s246, 2
          %s248 = smul.addr %s247, 8
          %s249 = scalar_lea.vmem %s3, %s248
        $region32: #{tpu_custom_call.1} parent=19 // pred_fallthru
          _
      $region20: #{tpu_custom_call.1} parent=5 // pred_fallthru
        _
      %p250 = scmp.le.s32.totalorder 1, %s17
      %p251 = scmp.lt.s32.totalorder %s17, 17
      %p252 = pnand %p250, %p251
      %p253 = pneg %p252
      // Predicated region
      $region33: #{tpu_custom_call.1} parent=5 // pred_check
        _
      $region34: #{tpu_custom_call.1} parent=5 // pred_check_branch
        %255 = sbr.rel (%p252) target = $region36
      $region35: #{tpu_custom_call.1} parent=5 // pred_region
        %s256 = ssub.s32 %s17, 1
        // Predicated region
        $region37: #{tpu_custom_call.1} parent=35 // pred_check
          %p257 = pneg %p57
        $region38: #{tpu_custom_call.1} parent=35 // pred_check_branch
          %259 = sbr.rel (%p257) target = $region40
        $region39: #{tpu_custom_call.1} parent=35 // pred_region
          %260 = dma.done [#allocation5], 16
        $region40: #{tpu_custom_call.1} parent=35 // pred_fallthru
          _
        %s261 = sand.u32 %s74, 1
        %s262 = scalar_lea.sflag [#allocation3], %s261
        %s263 = sand.u32 %s74, 1
        %s264 = smul.addr %s263, 32
        %s265 = scalar_lea.vmem [#allocation6], %s264
        // Predicated region
        $region41: #{tpu_custom_call.1} parent=35 // pred_check
          %p266 = pneg %p87
        $region42: #{tpu_custom_call.1} parent=35 // pred_check_branch
          %268 = sbr.rel (%p266) target = $region44
        $region43: #{tpu_custom_call.1} parent=35 // pred_region
          %269 = dma.done %s262, 512
        $region44: #{tpu_custom_call.1} parent=35 // pred_fallthru
          _
        %270 = sfence
        %p271 = pneg %p57
        %p272 = pneg %p54
        %s273 = sand.u32 %s74, 1
        %s274 = scalar_lea.sflag [#allocation3], %s273
        %s275 = sand.u32 %s74, 1
        %s276 = smul.addr %s275, 32
        %s277 = scalar_lea.vmem [#allocation6], %s276
        %p278 = pneg %p87
        %p279 = pneg %p84
        %p280 = scmp.lt.s32.totalorder %s29, 3
        %s281 = scalar_select %p280, %s29, 3
        %p282 = scmp.lt.s32.totalorder %s28, 1
        %s283 = scalar_select %p282, %s28, 1
        %p284 = scmp.lt.s32.totalorder %s27, 1
        %s285 = scalar_select %p284, %s27, 1
        %s286 = smul.addr %s283, 2
        %s287 = sadd.s32 %s285, %s286
        %s288 = smul.addr %s281, 4
        %s289 = sadd.s32 %s287, %s288
        %s290 = smul.addr %s289, 8
        %s291 = scalar_lea.vmem %s2, %s290
        %p292 = pneg %p117
        %p293 = pneg %p114
        %p294 = scmp.lt.s32.totalorder %s27, 1
        %s295 = scalar_select %p294, %s27, 1
        %s296 = smul.addr %s295, 2
        %s297 = smul.addr %s296, 8
        %s298 = scalar_lea.vmem %s3, %s297
        %p299 = pneg %p143
        %p300 = pneg %p140
        %p301 = pneg %p173
        %p302 = pneg %p170
        %s303 = sand.u32 %s160, 1
        %s304 = scalar_lea.sflag [#allocation4], %s303
        %s305 = sand.u32 %s160, 1
        %s306 = smul.addr %s305, 8
        %s307 = scalar_lea.vmem [#allocation7], %s306
        %p308 = scmp.lt.s32.totalorder %s29, 3
        %s309 = scalar_select %p308, %s29, 3
        %p310 = scmp.lt.s32.totalorder %s28, 1
        %s311 = scalar_select %p310, %s28, 1
        %p312 = scmp.lt.s32.totalorder %s27, 1
        %s313 = scalar_select %p312, %s27, 1
        %s314 = smul.addr %s311, 2
        %s315 = sadd.s32 %s313, %s314
        %s316 = smul.addr %s309, 4
        %s317 = sadd.s32 %s315, %s316
        %s318 = smul.addr %s317, 8
        %s319 = scalar_lea.vmem %s2, %s318
        %p320 = scmp.lt.s32.totalorder %s27, 1
        %s321 = scalar_select %p320, %s27, 1
        %s322 = smul.addr %s321, 2
        %s323 = smul.addr %s322, 8
        %s324 = scalar_lea.vmem %s3, %s323
        %v325 = vld [vmem:[%s324] sm:$0xff]
        %v326 = vld [vmem:[%s324 + $0x8] sm:$0xff]
        %s327 = sld [smem:[#allocation2 + %s27]]
        %v328 = vld [vmem:[%s265] sm:$0xff]
        %v329 = vld [vmem:[%s265 + $0x8] sm:$0xff]
        %v330 = vld [vmem:[%s265 + $0x10] sm:$0xff]
        %v331 = vld [vmem:[%s265 + $0x18] sm:$0xff]
        %vm332 = vcmask 261120
        %v334 = vsel %vm332, %v325, 0
        %v337 = vsel %vm332, %v326, 0
        %339 = vmatprep.subr.mxu0 0.0
        %340 = vmatpush1.msra.mxu0 %v328
        %341 = vmatprep.subr.mxu0 0.0
        %342 = vmatpush1.msra.mxu0 %v329
        %343 = vmatprep.subr.mxu0 0.0
        %344 = vmatpush1.msra.mxu0 %v330
        %345 = vmatprep.subr.mxu0 0.0
        %346 = vmatpush1.msra.mxu0 %v331
        %347 = vmatprep.subr.mxu0 0.0
        %348 = vmatpush1.msra.mxu0 0.0
        %349 = vmatprep.subr.mxu0 0.0
        %350 = vmatpush1.msra.mxu0 0.0
        %351 = vmatprep.subr.mxu0 0.0
        %352 = vmatpush1.msra.mxu0 0.0
        %353 = vmatprep.subr.mxu0 0.0
        %354 = vmatpush1.msra.mxu0 0.0
        %355 = vmatprep.subr.mxu0 0.0
        %356 = vmatpush1.msra.mxu0 0.0
        %357 = vmatprep.subr.mxu0 0.0
        %358 = vmatpush1.msra.mxu0 0.0
        %359 = vmatprep.subr.mxu0 0.0
        %360 = vmatpush1.msra.mxu0 0.0
        %361 = vmatprep.subr.mxu0 0.0
        %362 = vmatpush1.msra.mxu0 0.0
        %363 = vmatprep.subr.mxu0 0.0
        %364 = vmatpush1.msra.mxu0 0.0
        %365 = vmatprep.subr.mxu0 0.0
        %366 = vmatpush1.msra.mxu0 0.0
        %367 = vmatprep.subr.mxu0 0.0
        %368 = vmatpush1.msra.mxu0 0.0
        %369 = vmatprep.subr.mxu0 0.0
        %370 = vmatpush1.msra.mxu0 0.0
        %371 = vmatprep.subr.mxu0 0.0
        %372 = vmatpush1.msra.mxu0 0.0
        %373 = vmatprep.subr.mxu0 0.0
        %374 = vmatpush1.msra.mxu0 0.0
        %375 = vmatprep.subr.mxu0 0.0
        %376 = vmatpush1.msra.mxu0 0.0
        %377 = vmatprep.subr.mxu0 0.0
        %378 = vmatpush1.msra.mxu0 0.0
        %379 = vmatprep.subr.mxu0 0.0
        %380 = vmatpush1.msra.mxu0 0.0
        %381 = vmatprep.subr.mxu0 0.0
        %382 = vmatpush1.msra.mxu0 0.0
        %383 = vmatprep.subr.mxu0 0.0
        %384 = vmatpush1.msra.mxu0 0.0
        %385 = vmatprep.subr.mxu0 0.0
        %386 = vmatpush1.msra.mxu0 0.0
        %387 = vmatprep.subr.mxu0 0.0
        %388 = vmatpush1.msra.mxu0 0.0
        %389 = vmatprep.subr.mxu0 0.0
        %390 = vmatpush1.msra.mxu0 0.0
        %391 = vmatprep.subr.mxu0 0.0
        %392 = vmatpush1.msra.mxu0 0.0
        %393 = vmatprep.subr.mxu0 0.0
        %394 = vmatpush1.msra.mxu0 0.0
        %395 = vmatprep.subr.mxu0 0.0
        %396 = vmatpush1.msra.mxu0 0.0
        %397 = vmatprep.subr.mxu0 0.0
        %398 = vmatpush1.msra.mxu0 0.0
        %399 = vmatprep.subr.mxu0 0.0
        %400 = vmatpush1.msra.mxu0 0.0
        %401 = vmatprep.subr.mxu0 0.0
        %402 = vmatpush1.msra.mxu0 0.0
        %403 = vmatprep.mubr.f32.mxu0 0.0
        %404 = vmatmul.mubr.f32.gmra.mrb[0].mxu0 %v334
        %v405 = vpop.f32.mrb[0].mxu0
        %v406 = vadd.f32 0.0, %v405
        %v407 = vpop.f32.mrb[0].mxu0
        %408 = vmatprep.mubr.f32.mxu0 0.0
        %409 = vmatmul.mubr.f32.gmra.mrb[0].mxu0 %v337
        %v410 = vpop.f32.mrb[0].mxu0
        %v411 = vadd.f32 0.0, %v410
        %v412 = vpop.f32.mrb[0].mxu0
        %413 = vdwg.mxu0
        %v414 = vld [vmem:[%s319] sm:$0xff]
        %416 = vrot.lane.b32.xlu0 %v406, 127
        %v417 = vpop.permute.xlu0 %416
        %420 = vrot.lane.b32.xlu0 %v414, 127
        %v421 = vpop.permute.xlu0 %420
        %vm423 = vcmask 1039360
        %v424 = vsel %vm423, %v417, %v421
        %v425 = vadd.f32 %v411, %v424
        %v426 = vstv %s327
        %v427 = vadd.f32 %v425, %v426
        %428 = vst [vmem:[%s307] sm:$0xff] %v427
        %s429 = sand.u32 %s160, 1
        %s430 = scalar_lea.sflag [#allocation4], %s429
        %s431 = sand.u32 %s160, 1
        %s432 = smul.addr %s431, 8
        %s433 = scalar_lea.vmem [#allocation7], %s432
        // Predicated region
        $region45: #{tpu_custom_call.1} parent=35 // pred_check
          %p434 = pneg %p170
        $region46: #{tpu_custom_call.1} parent=35 // pred_check_branch
          %436 = sbr.rel (%p434) target = $region48
        $region47: #{tpu_custom_call.1} parent=35 // pred_region
          %s438 = ssub.s32 128, 128
          %439 = vsyncadd %s430, %s438
          %s440 = smul.addr %s27, 4
          %s441 = sadd.s32 %s29, %s440
          %s442 = smul.addr %s28, 8
          %s443 = sadd.s32 %s441, %s442
          %s444 = smul.addr %s443, 128
          %s445 = scalar_lea.hbm %s4, %s444
          %s447 = sshll.u32 %s433, 4
          %s448 = int_to_ptr.vmem [resolvable:$true] %s447
          %450 = dma.vmem_to_hbm [thread:$0]  %s448, 128, %s445, %s430
        $region48: #{tpu_custom_call.1} parent=35 // pred_fallthru
          _
      $region36: #{tpu_custom_call.1} parent=5 // pred_fallthru
        _
      %p451 = scmp.le.s32.totalorder 2, %s17
      // Predicated region
      $region49: #{tpu_custom_call.1} parent=5 // pred_check
        %p452 = pneg %p451
      $region50: #{tpu_custom_call.1} parent=5 // pred_check_branch
        %454 = sbr.rel (%p452) target = $region52
      $region51: #{tpu_custom_call.1} parent=5 // pred_region
        %s455 = ssub.s32 %s17, 2
        // Predicated region
        $region53: #{tpu_custom_call.1} parent=51 // pred_check
          %p456 = pneg %p176
        $region54: #{tpu_custom_call.1} parent=51 // pred_check_branch
          %458 = sbr.rel (%p456) target = $region56
        $region55: #{tpu_custom_call.1} parent=51 // pred_region
          %s459 = sand.u32 %s161, 1
          %s460 = scalar_lea.sflag [#allocation4], %s459
          %s461 = sand.u32 %s161, 1
          %s462 = smul.addr %s461, 8
          %s463 = scalar_lea.vmem [#allocation7], %s462
          %464 = dma.done %s460, 128
        $region56: #{tpu_custom_call.1} parent=51 // pred_fallthru
          _
      $region52: #{tpu_custom_call.1} parent=5 // pred_fallthru
        _
    $region6: #{tpu_custom_call.1} parent=1 // loop_footer
      %s21 = sadd.s32 1, %s17
    $region7: #{tpu_custom_call.1} parent=1 // loop_footer_branch
      %16 = sbr.rel target = $region3
    $region8: #{tpu_custom_call.1} parent=1 // loop_exit
      _
    %465 = vsyncpa [#allocation3], 1
    %s466 = scalar_lea.sflag [#allocation3], 1
    %467 = vsyncpa %s466, 1
    %468 = vsyncpa [#allocation4], 1
    %s469 = scalar_lea.sflag [#allocation4], 1
    %470 = vsyncpa %s469, 1
    %471 = vsyncpa [#allocation5], 1
    %s472 = scalar_lea.sflag [#allocation5], 1
    %473 = vsyncpa %s472, 1

</llo_original>
